<compile_context>
chip_gen: v5e
topology: v5e:2x2
jax: 0.10.0
libtpu: 0.0.40
codegen_flags: <defaults>
</compile_context>

<pallas_src>
import functools

import jax
import jax.numpy as jnp
from jax.experimental import pallas as pl
from jax.experimental.pallas import tpu as pltpu


# ---------------------------------------------------------------------------
# Kernels
# ---------------------------------------------------------------------------

def _swiglu_resident_kernel(x_ref, wg_ref, wu_ref, wd_ref, o_ref):
    """Whole intermediate dim per step (ti == I): 1-D grid, no accumulator.
    Weight blocks have constant index maps, so they are DMA'd once."""
    x = x_ref[...]
    g = jnp.dot(x, wg_ref[...], preferred_element_type=jnp.float32)
    u = jnp.dot(x, wu_ref[...], preferred_element_type=jnp.float32)
    h = (g * jax.nn.sigmoid(g)) * u                     # SiLU(g) * u in f32
    o_ref[...] = jnp.dot(h.astype(wd_ref.dtype), wd_ref[...],
                         preferred_element_type=jnp.float32).astype(o_ref.dtype)


def _swiglu_reduce_kernel(x_ref, wg_ref, wu_ref, wd_ref, o_ref, acc_ref):
    """grid = (M_tiles, I_tiles); the intermediate axis is the reduction axis
    of the down projection, so the output tile stays resident in a VMEM f32
    accumulator (init at k==0, writeback at k==last)."""
    k = pl.program_id(1)

    @pl.when(k == 0)
    def _():
        acc_ref[...] = jnp.zeros_like(acc_ref)

    x = x_ref[...]
    g = jnp.dot(x, wg_ref[...], preferred_element_type=jnp.float32)
    u = jnp.dot(x, wu_ref[...], preferred_element_type=jnp.float32)
    h = (g * jax.nn.sigmoid(g)) * u
    acc_ref[...] += jnp.dot(h.astype(wd_ref.dtype), wd_ref[...],
                            preferred_element_type=jnp.float32)

    @pl.when(k == pl.num_programs(1) - 1)
    def _():
        o_ref[...] = acc_ref[...].astype(o_ref.dtype)


# ---------------------------------------------------------------------------
# Per-generation VMEM budgeting & tile selection
# ---------------------------------------------------------------------------

@functools.lru_cache(maxsize=None)
def _tpu_vmem_capacity_bytes():
    """Physical per-core VMEM (64 MiB on v7x, 128 MiB on v4/v5e/v6e)."""
    try:
        cap = getattr(pltpu.get_tpu_info(), "vmem_capacity_bytes", None)
        if cap:
            return int(cap)
    except Exception:
        pass
    try:
        kind = jax.devices()[0].device_kind.lower()
        if "v7" in kind:
            return 64 * 1024 * 1024
        if "v4" in kind or "v5" in kind or "v6" in kind:
            return 128 * 1024 * 1024
    except Exception:
        pass
    return 64 * 1024 * 1024  # conservative default


def _round_up(x, m):
    return ((x + m - 1) // m) * m


def _vmem_tile_bytes(tm, ti, H, I, itemsize):
    """Estimated VMEM working set for one grid step (double-buffered operands,
    f32 intermediates, accumulator, and slack for Mosaic internal scratch)."""
    dbuf = 2                                            # default pipelining depth
    w = dbuf * itemsize * (2 * H * ti + ti * H)         # gate + up + down tiles
    io = dbuf * itemsize * (2 * tm * H)                 # x tile + out tile
    inter = 4 * tm * ti * 3                             # f32 g / u / h
    acc = 0 if ti >= I else 4 * tm * H                  # resident f32 accumulator
    slack = 2 << 20                                     # compiler internal scratch
    return w + io + inter + acc + slack


_TM_CANDS = (1024, 512, 256, 128, 64, 32, 16, 8)


def _pick_tiles(M, H, I, itemsize, tm_req, ti_req, budget):
    """Choose (tm, ti).

    Priorities (within the per-generation VMEM budget):
      1. weights-resident path (ti == I): weights DMA'd from HBM exactly once,
         independent of M.
      2. reduce path: maximise tm (weight HBM traffic = (M/tm) passes over
         3*H*I bytes — the roofline lever), keep ti >= 256 so the down-proj
         contraction fills the 256-deep MXU on v6e/v7x; ti == 128 last resort.
    """
    # Row-tile candidates: never larger than the (padded) row count, and keep
    # at least 2 row tiles when M allows so both v7x TensorCores get work.
    tm_cap = min(_round_up(max(M, 1), 8), _TM_CANDS[0])
    if M >= 16:
        tm_cap = min(tm_cap, max(8, _round_up(pl.cdiv(M, 2), 8)))
    if tm_req is not None:
        tm_cands = [tm_req]
    else:
        tm_cands = [t for t in _TM_CANDS if t <= tm_cap] or [8]

    if ti_req is not None:
        ti_resident = [I] if ti_req >= I else []
        ti_reduce = [ti_req] if ti_req < I else []
    else:
        ti_resident = [I]
        ti_reduce = [t for t in (2048, 1792, 1536, 1280, 1024, 768, 512, 384, 256)
                     if t < I and I % t == 0]
        if I > 128 and I % 128 == 0:
            ti_reduce.append(128)

    # 1) weights-resident fast path (as long as a reasonable row tile fits).
    min_resident_tm = min(64, tm_cands[0])
    for cti in ti_resident:
        for ctm in tm_cands:
            if ctm < min_resident_tm:
                break
            if _vmem_tile_bytes(ctm, cti, H, I, itemsize) <= budget:
                return ctm, cti

    # 2) reduce path: big tm first; ti < 256 only if nothing wider fits.
    for allow_narrow in (False, True):
        for ctm in tm_cands:
            for cti in ti_reduce:
                if cti < 256 and not allow_narrow:
                    continue
                if _vmem_tile_bytes(ctm, cti, H, I, itemsize) <= budget:
                    return ctm, cti

    # 3) best effort with the smallest tiles (caller validates against
    #    physical capacity and raises a clear error instead of OOM-ing).
    if ti_reduce:
        return tm_cands[-1], ti_reduce[-1]
    return tm_cands[-1], ti_resident[-1]


# ---------------------------------------------------------------------------
# Wrapper
# ---------------------------------------------------------------------------

@functools.partial(jax.jit, static_argnames=("tm", "ti"))
def swiglu_mlp(x, wg_t, wu_t, wd_t, *, tm=None, ti=None):
    """x: [B, S, H]; wg_t, wu_t: [H, I]; wd_t: [I, H]. Returns [B, S, H].

    Weights are the PyTorch nn.Linear weights transposed once at load time
    ([in, out] layout); no per-call weight reshuffling happens here.
    """
    B, S, H = x.shape
    I = wg_t.shape[1]
    M = B * S
    itemsize = jnp.dtype(x.dtype).itemsize

    capacity = _tpu_vmem_capacity_bytes()
    budget = int(capacity * 0.70)               # working-set budget for tiling
    tm, ti = _pick_tiles(M, H, I, itemsize, tm, ti, budget)

    est = _vmem_tile_bytes(tm, ti, H, I, itemsize)
    if est > int(capacity * 0.95):
        raise ValueError(
            f"SwiGLU tiling (tm={tm}, ti={ti}) needs ~{est >> 20} MiB VMEM, "
            f"exceeding this TPU's ~{capacity >> 20} MiB per-core VMEM.")
    if ti < I and I % ti != 0:
        raise ValueError(f"ti={ti} must divide intermediate_size={I}")

    vmem_limit = int(min(max(est + (8 << 20), 32 << 20), capacity * 0.82))

    x2 = x.reshape(M, H)
    M_pad = _round_up(M, tm)
    if M_pad != M:
        # Pad awkward row counts with zero rows (independent rows; sliced off).
        x2 = jnp.pad(x2, ((0, M_pad - M), (0, 0)))
    n_m = M_pad // tm

    if ti >= I:
        # Weights-resident fast path: constant block indices -> each weight is
        # DMA'd from HBM exactly once, regardless of how many row tiles stream.
        cost = pl.CostEstimate(
            flops=6 * M * H * I,
            transcendentals=M * I,
            bytes_accessed=itemsize * (2 * M * H + 3 * H * I))
        out2 = pl.pallas_call(
            _swiglu_resident_kernel,
            out_shape=jax.ShapeDtypeStruct((M_pad, H), x.dtype),
            grid_spec=pltpu.PrefetchScalarGridSpec(
                num_scalar_prefetch=0,
                grid=(n_m,),
                in_specs=[
                    pl.BlockSpec((tm, H), lambda i: (i, 0)),   # x rows
                    pl.BlockSpec((H, I), lambda i: (0, 0)),    # gate_proj.T
                    pl.BlockSpec((H, I), lambda i: (0, 0)),    # up_proj.T
                    pl.BlockSpec((I, H), lambda i: (0, 0)),    # down_proj.T
                ],
                out_specs=pl.BlockSpec((tm, H), lambda i: (i, 0)),
            ),
            compiler_params=pltpu.CompilerParams(
                dimension_semantics=("parallel",),
                vmem_limit_bytes=vmem_limit),
            cost_estimate=cost,
        )(x2, wg_t, wu_t, wd_t)
    else:
        n_i = I // ti
        cost = pl.CostEstimate(
            flops=6 * M * H * I,
            transcendentals=M * I,
            # weights are re-streamed once per row-tile pass
            bytes_accessed=itemsize * (2 * M * H + n_m * 3 * H * I))
        out2 = pl.pallas_call(
            _swiglu_reduce_kernel,
            out_shape=jax.ShapeDtypeStruct((M_pad, H), x.dtype),
            grid_spec=pltpu.PrefetchScalarGridSpec(
                num_scalar_prefetch=0,
                grid=(n_m, n_i),
                in_specs=[
                    pl.BlockSpec((tm, H), lambda i, k: (i, 0)),   # x rows
                    pl.BlockSpec((H, ti), lambda i, k: (0, k)),   # gate_proj.T
                    pl.BlockSpec((H, ti), lambda i, k: (0, k)),   # up_proj.T
                    pl.BlockSpec((ti, H), lambda i, k: (k, 0)),   # down_proj.T
                ],
                out_specs=pl.BlockSpec((tm, H), lambda i, k: (i, 0)),
                scratch_shapes=[pltpu.VMEM((tm, H), jnp.float32)],
            ),
            compiler_params=pltpu.CompilerParams(
                dimension_semantics=("parallel", "arbitrary"),
                vmem_limit_bytes=vmem_limit),
            cost_estimate=cost,
        )(x2, wg_t, wu_t, wd_t)
        # TODO(synk): if DMA is still exposed on v5e, sweep pipeline_mode=
        # pl.Buffered(3) on the streamed weight specs (needs budget headroom).

    if M_pad != M:
        out2 = out2[:M]
    return out2.reshape(B, S, H)


def reference_mlp(x, wg_t, wu_t, wd_t):
    g = x @ wg_t
    u = x @ wu_t
    return (g * jax.nn.sigmoid(g) * u) @ wd_t


if __name__ == "__main__":
    # Small config consistent with TransformerMLP: hidden_size=128,
    # intermediate_size=256, batch=2, seq=8.
    B, S, H, I = 2, 8, 128, 256
    key = jax.random.PRNGKey(0)
    kx, kg, ku, kd = jax.random.split(key, 4)

    init_range = 0.02  # TransformerConfig.initializer_range
    x = jax.random.normal(kx, (B, S, H), dtype=jnp.float32)
    # PyTorch nn.Linear weights are [out, in]; transpose once at "load" time.
    wg_t = (init_range * jax.random.normal(kg, (I, H), dtype=jnp.float32)).T
    wu_t = (init_range * jax.random.normal(ku, (I, H), dtype=jnp.float32)).T
    wd_t = (init_range * jax.random.normal(kd, (H, I), dtype=jnp.float32)).T

    ref = reference_mlp(x, wg_t, wu_t, wd_t)

    # Path 1 (auto tiles): whole weights fit in VMEM -> resident fast path.
    out1 = jax.block_until_ready(swiglu_mlp(x, wg_t, wu_t, wd_t))
    assert out1.shape == (B, S, H)
    assert jnp.allclose(out1, ref, atol=1e-5, rtol=1e-5)

    # Path 2: force intermediate tiling to exercise the reduction kernel.
    out2 = jax.block_until_ready(swiglu_mlp(x, wg_t, wu_t, wd_t, ti=128))
    assert jnp.allclose(out2, ref, atol=1e-5, rtol=1e-5)

    print("KERNEL_OK")
</pallas_src>

<mosaic_0001>
module attributes {stable_mosaic.version = 11 : i64} {
  func.func @_swiglu_resident_kernel(%arg0: i32, %arg1: memref<8x128xf32, #tpu.memory_space<vmem>>, %arg2: memref<128x256xf32, #tpu.memory_space<vmem>>, %arg3: memref<128x256xf32, #tpu.memory_space<vmem>>, %arg4: memref<256x128xf32, #tpu.memory_space<vmem>>, %arg5: memref<8x128xf32, #tpu.memory_space<vmem>>) attributes {dimension_semantics = [#tpu.dimension_semantics<parallel>], iteration_bounds = array<i64: 2>, scalar_prefetch = 0 : i64, scratch_operands = 0 : i64, tpu.core_type = #tpu.core_type<tc>, window_params = [{transform_indices = @transform_0, window_bounds = array<i64: 8, 128>}, {pipeline_mode = #tpu.pipeline_mode<synchronous>, transform_indices = @transform_1, window_bounds = array<i64: 128, 256>}, {pipeline_mode = #tpu.pipeline_mode<synchronous>, transform_indices = @transform_2, window_bounds = array<i64: 128, 256>}, {pipeline_mode = #tpu.pipeline_mode<synchronous>, transform_indices = @transform_3, window_bounds = array<i64: 256, 128>}, {transform_indices = @transform_4, window_bounds = array<i64: 8, 128>}]} {
    %c0 = arith.constant 0 : index
    %c0_0 = arith.constant 0 : index
    %0 = vector.load %arg1[%c0, %c0_0] : memref<8x128xf32, #tpu.memory_space<vmem>>, vector<8x128xf32>
    %c0_1 = arith.constant 0 : index
    %c0_2 = arith.constant 0 : index
    %1 = vector.load %arg2[%c0_1, %c0_2] : memref<128x256xf32, #tpu.memory_space<vmem>>, vector<128x256xf32>
    %cst = arith.constant dense<0.000000e+00> : vector<8x256xf32>
    %2 = tpu.matmul %0, %1, %cst {dimension_numbers = #tpu.dot_dimension_numbers<[1], [0], [0], [1], [0, 0, 1, 1], [], []>} : vector<8x128xf32>, vector<128x256xf32>, vector<8x256xf32> -> vector<8x256xf32>
    %c0_3 = arith.constant 0 : index
    %c0_4 = arith.constant 0 : index
    %3 = vector.load %arg3[%c0_3, %c0_4] : memref<128x256xf32, #tpu.memory_space<vmem>>, vector<128x256xf32>
    %cst_5 = arith.constant dense<0.000000e+00> : vector<8x256xf32>
    %4 = tpu.matmul %0, %3, %cst_5 {dimension_numbers = #tpu.dot_dimension_numbers<[1], [0], [0], [1], [0, 0, 1, 1], [], []>} : vector<8x128xf32>, vector<128x256xf32>, vector<8x256xf32> -> vector<8x256xf32>
    %5 = arith.negf %2 : vector<8x256xf32>
    %6 = math.exp %5 : vector<8x256xf32>
    %cst_6 = arith.constant 1.000000e+00 : f32
    %7 = vector.broadcast %cst_6 : f32 to vector<8x256xf32>
    %8 = arith.addf %7, %6 : vector<8x256xf32>
    %9 = arith.divf %7, %8 : vector<8x256xf32>
    %10 = arith.mulf %2, %9 : vector<8x256xf32>
    %11 = arith.mulf %10, %4 : vector<8x256xf32>
    %c0_7 = arith.constant 0 : index
    %c0_8 = arith.constant 0 : index
    %12 = vector.load %arg4[%c0_7, %c0_8] : memref<256x128xf32, #tpu.memory_space<vmem>>, vector<256x128xf32>
    %cst_9 = arith.constant dense<0.000000e+00> : vector<8x128xf32>
    %13 = tpu.matmul %11, %12, %cst_9 {dimension_numbers = #tpu.dot_dimension_numbers<[1], [0], [0], [1], [0, 0, 1, 1], [], []>} : vector<8x256xf32>, vector<256x128xf32>, vector<8x128xf32> -> vector<8x128xf32>
    %c0_10 = arith.constant 0 : index
    %c0_11 = arith.constant 0 : index
    %14 = vector.load %arg5[%c0_10, %c0_11] : memref<8x128xf32, #tpu.memory_space<vmem>>, vector<8x128xf32>
    tpu.vector_store %arg5[%c0_10, %c0_11], %13 {strides = array<i32>} : memref<8x128xf32, #tpu.memory_space<vmem>>, vector<8x128xf32>,
    return
  }
  func.func @transform_0(%arg0: i32) -> (i32, i32) {
    %c0_i32 = arith.constant 0 : i32
    %c0_i32_0 = arith.constant 0 : i32
    return %arg0, %c0_i32 : i32, i32
  }
  func.func @transform_1(%arg0: i32) -> (i32, i32) {
    %c0_i32 = arith.constant 0 : i32
    %c0_i32_0 = arith.constant 0 : i32
    %c0_i32_1 = arith.constant 0 : i32
    return %c0_i32, %c0_i32_0 : i32, i32
  }
  func.func @transform_2(%arg0: i32) -> (i32, i32) {
    %c0_i32 = arith.constant 0 : i32
    %c0_i32_0 = arith.constant 0 : i32
    %c0_i32_1 = arith.constant 0 : i32
    return %c0_i32, %c0_i32_0 : i32, i32
  }
  func.func @transform_3(%arg0: i32) -> (i32, i32) {
    %c0_i32 = arith.constant 0 : i32
    %c0_i32_0 = arith.constant 0 : i32
    %c0_i32_1 = arith.constant 0 : i32
    return %c0_i32, %c0_i32_0 : i32, i32
  }
  func.func @transform_4(%arg0: i32) -> (i32, i32) {
    %c0_i32 = arith.constant 0 : i32
    %c0_i32_0 = arith.constant 0 : i32
    return %arg0, %c0_i32 : i32, i32
  }
}

</mosaic_0001>

<llo_original>
// kernel: swiglu_mlp.1
$region0: #{swiglu_mlp.1}
  #allocation0 [shape = 'u32[]', space=smem, size = 0x4, offset = 0x4, fixed_abs, tag = 'smem constant byte address 0x4 - core index']
  #allocation1 [shape = 'u32[72,128]{1,0:T(1,128)}', space=vmem, size = 0x9000, scoped, tag = 'internal scratch']
  %s0 = inlined_call_operand.hbm [shape: f32[16,128], index: 0, kind: input, shape index: {}]
  %s1 = inlined_call_operand.hbm [shape: f32[128,256], index: 1, kind: input, shape index: {}]
  %s2 = inlined_call_operand.hbm [shape: f32[128,256], index: 2, kind: input, shape index: {}]
  %s3 = inlined_call_operand.hbm [shape: f32[256,128], index: 3, kind: input, shape index: {}]
  %s4 = inlined_call_operand.hbm [shape: f32[16,128], index: 4, kind: output, shape index: {}]
  %s5 = sld [smem:[#allocation0]]
  $region65: #{swiglu_mlp.1} parent=0
    _
  %s7 = ssub.s32 1, %s5
  %s8 = scalar_select 0, %s7, %s5
  $region1: #{swiglu_mlp.1} parent=0
    #allocation2 [shape = 'u8[8192]{0}', space=vmem, size = 0x2000, scoped, tag = 'input window, operand 0']
    #allocation3 [shape = 's32[2]{0}', space=sflag, size = 0x8, scoped, tag = 'scoped memory for swiglu_mlp.1']
    #allocation4 [shape = 's32[2]{0}', space=sflag, size = 0x8, scoped, tag = 'scoped memory for swiglu_mlp.1']
    #allocation5 [shape = 'u8[131072]{0}', space=vmem, size = 0x20000, scoped, tag = 'input window, operand 1, single buffered']
    #allocation6 [shape = 's32[1]{0}', space=sflag, size = 0x4, scoped, tag = 'scoped memory for swiglu_mlp.1']
    #allocation7 [shape = 'u8[131072]{0}', space=vmem, size = 0x20000, scoped, tag = 'input window, operand 2, single buffered']
    #allocation8 [shape = 'u8[131072]{0}', space=vmem, size = 0x20000, scoped, tag = 'input window, operand 3, single buffered']
    #allocation9 [shape = 's32[1]{0}', space=sflag, size = 0x4, scoped, tag = 'scoped memory for swiglu_mlp.1']
    #allocation10 [shape = 'u8[8192]{0}', space=vmem, size = 0x2000, scoped, tag = 'output window, operand 0']
    %9 = vsyncpa [#allocation3], 0
    %s10 = scalar_lea.sflag [#allocation3], 1
    %11 = vsyncpa %s10, 0
    %12 = vsyncpa [#allocation6], 0
    %13 = vsyncpa [#allocation9], 0
    %14 = vsyncpa [#allocation4], 0
    %s15 = scalar_lea.sflag [#allocation4], 1
    %16 = vsyncpa %s15, 0
    loop: start=0, step=1, limit=4
    $region2: #{swiglu_mlp.1} parent=1 // loop_pre_header
      _
    $region3: #{swiglu_mlp.1} parent=1 // loop_header
      %s18 = sphi 0, %s22
      %p19 = scmp.ge.s32.totalorder %s18, 4
      %s28 = sphi 0, %s30
      %s31 = sphi 0, %s28
      %s32 = sphi 0, %s31
      %s48 = sphi 0, %s32
      %s52 = sphi 0, %s52
      %s54 = sphi 0, %s52
      %s55 = sphi 0, %s54
      %s69 = sphi 0, %s55
      %s73 = sphi 0, %s73
      %s75 = sphi 0, %s73
      %s76 = sphi 0, %s75
      %s90 = sphi 0, %s76
      %s94 = sphi 0, %s94
      %s96 = sphi 0, %s94
      %s97 = sphi 0, %s96
      %s111 = sphi 0, %s97
      %s117 = sphi 0, %s119
      %s120 = sphi 0, %s117
      %s121 = sphi 0, %s120
      %s137 = sphi 0, %s121
    $region4: #{swiglu_mlp.1} parent=1 // loop_header_branch
      %21 = sbr.rel (%p19) target = $region8
    $region5: #{swiglu_mlp.1} parent=1 // loop_body
      %s23 = ssub.s32 %s18, 1
      %s24 = ssub.s32 %s18, 2
      %s25 = sadd.s32 %s18, 1
      %s26 = ssub.s32 %s18, %s25
      %p27 = scmp.eq.s32.totalorder %s26, 0
      %s29 = sadd.s32 %s28, 1
      %s30 = scalar_select %p27, %s28, %s29
      %p33 = pneg %p27
      %p34 = scmp.eq.s32.totalorder %s18, 1
      %p35 = por %p33, %p34
      %p36 = scmp.ne.s32.totalorder %s28, %s31
      %p37 = scmp.eq.s32.totalorder %s18, 0
      %p38 = por %p36, %p37
      %p39 = scmp.ne.s32.totalorder %s28, %s31
      %p40 = scmp.eq.s32.totalorder %s23, 1
      %p41 = por %p39, %p40
      %p42 = scmp.ne.s32.totalorder %s31, %s32
      %p43 = scmp.eq.s32.totalorder %s23, 0
      %p44 = por %p42, %p43
      %p45 = scmp.ne.s32.totalorder %s31, %s32
      %p46 = scmp.eq.s32.totalorder %s24, 1
      %p47 = por %p45, %p46
      %p49 = scmp.ne.s32.totalorder %s32, %s48
      %p50 = scmp.eq.s32.totalorder %s24, 0
      %p51 = por %p49, %p50
      %s53 = sadd.s32 %s52, 1
      %p56 = scmp.eq.s32.totalorder %s18, 1
      %p57 = scmp.ne.s32.totalorder %s52, %s54
      %p58 = scmp.eq.s32.totalorder %s18, 0
      %p59 = por %p57, %p58
      %p60 = scmp.ne.s32.totalorder %s52, %s54
      %p61 = scmp.eq.s32.totalorder %s23, 1
      %p62 = por %p60, %p61
      %p63 = scmp.ne.s32.totalorder %s54, %s55
      %p64 = scmp.eq.s32.totalorder %s23, 0
      %p65 = por %p63, %p64
      %p66 = scmp.ne.s32.totalorder %s54, %s55
      %p67 = scmp.eq.s32.totalorder %s24, 1
      %p68 = por %p66, %p67
      %p70 = scmp.ne.s32.totalorder %s55, %s69
      %p71 = scmp.eq.s32.totalorder %s24, 0
      %p72 = por %p70, %p71
      %s74 = sadd.s32 %s73, 1
      %p77 = scmp.eq.s32.totalorder %s18, 1
      %p78 = scmp.ne.s32.totalorder %s73, %s75
      %p79 = scmp.eq.s32.totalorder %s18, 0
      %p80 = por %p78, %p79
      %p81 = scmp.ne.s32.totalorder %s73, %s75
      %p82 = scmp.eq.s32.totalorder %s23, 1
      %p83 = por %p81, %p82
      %p84 = scmp.ne.s32.totalorder %s75, %s76
      %p85 = scmp.eq.s32.totalorder %s23, 0
      %p86 = por %p84, %p85
      %p87 = scmp.ne.s32.totalorder %s75, %s76
      %p88 = scmp.eq.s32.totalorder %s24, 1
      %p89 = por %p87, %p88
      %p91 = scmp.ne.s32.totalorder %s76, %s90
      %p92 = scmp.eq.s32.totalorder %s24, 0
      %p93 = por %p91, %p92
      %s95 = sadd.s32 %s94, 1
      %p98 = scmp.eq.s32.totalorder %s18, 1
      %p99 = scmp.ne.s32.totalorder %s94, %s96
      %p100 = scmp.eq.s32.totalorder %s18, 0
      %p101 = por %p99, %p100
      %p102 = scmp.ne.s32.totalorder %s94, %s96
      %p103 = scmp.eq.s32.totalorder %s23, 1
      %p104 = por %p102, %p103
      %p105 = scmp.ne.s32.totalorder %s96, %s97
      %p106 = scmp.eq.s32.totalorder %s23, 0
      %p107 = por %p105, %p106
      %p108 = scmp.ne.s32.totalorder %s96, %s97
      %p109 = scmp.eq.s32.totalorder %s24, 1
      %p110 = por %p108, %p109
      %p112 = scmp.ne.s32.totalorder %s97, %s111
      %p113 = scmp.eq.s32.totalorder %s24, 0
      %p114 = por %p112, %p113
      %s115 = ssub.s32 %s18, %s25
      %p116 = scmp.eq.s32.totalorder %s115, 0
      %s118 = sadd.s32 %s117, 1
      %s119 = scalar_select %p116, %s117, %s118
      %p122 = pneg %p116
      %p123 = scmp.eq.s32.totalorder %s18, 1
      %p124 = por %p122, %p123
      %p125 = scmp.ne.s32.totalorder %s117, %s120
      %p126 = scmp.eq.s32.totalorder %s18, 0
      %p127 = por %p125, %p126
      %p128 = scmp.ne.s32.totalorder %s117, %s120
      %p129 = scmp.eq.s32.totalorder %s23, 1
      %p130 = por %p128, %p129
      %p131 = scmp.ne.s32.totalorder %s120, %s121
      %p132 = scmp.eq.s32.totalorder %s23, 0
      %p133 = por %p131, %p132
      %p134 = scmp.ne.s32.totalorder %s120, %s121
      %p135 = scmp.eq.s32.totalorder %s24, 1
      %p136 = por %p134, %p135
      %p138 = scmp.ne.s32.totalorder %s121, %s137
      %p139 = scmp.eq.s32.totalorder %s24, 0
      %p140 = por %p138, %p139
      %p141 = scmp.le.s32.totalorder 1, %s18
      %p142 = scmp.lt.s32.totalorder %s18, 3
      %p143 = pnand %p141, %p142
      %p144 = pneg %p143
      // Predicated region
      $region9: #{swiglu_mlp.1} parent=5 // pred_check
        _
      $region10: #{swiglu_mlp.1} parent=5 // pred_check_branch
        %146 = sbr.rel (%p143) target = $region12
      $region11: #{swiglu_mlp.1} parent=5 // pred_region
        %s147 = ssub.s32 %s18, 1
        // Predicated region
        $region13: #{swiglu_mlp.1} parent=11 // pred_check
          %p148 = pneg %p65
        $region14: #{swiglu_mlp.1} parent=11 // pred_check_branch
          %150 = sbr.rel (%p148) target = $region16
        $region15: #{swiglu_mlp.1} parent=11 // pred_region
          %152 = vsyncadd [#allocation6], 0
          %s153 = sshll.u32 %s1, 4
          %s154 = int_to_ptr.hbm [resolvable:$true] %s153
          %s155 = sshll.u32 [#allocation5], 4
          %s156 = int_to_ptr.vmem [resolvable:$true] %s155
          %161 = dma.hbm_to_vmem [thread:$0]  %s154, 4096, %s156, [#allocation6], 256, 256, 16
        $region16: #{swiglu_mlp.1} parent=11 // pred_fallthru
          _
        // Predicated region
        $region17: #{swiglu_mlp.1} parent=11 // pred_check
          %p162 = pneg %p86
        $region18: #{swiglu_mlp.1} parent=11 // pred_check_branch
          %164 = sbr.rel (%p162) target = $region20
        $region19: #{swiglu_mlp.1} parent=11 // pred_region
          %166 = vsyncadd [#allocation6], 0
          %s167 = sshll.u32 %s2, 4
          %s168 = int_to_ptr.hbm [resolvable:$true] %s167
          %s169 = sshll.u32 [#allocation7], 4
          %s170 = int_to_ptr.vmem [resolvable:$true] %s169
          %175 = dma.hbm_to_vmem [thread:$0]  %s168, 4096, %s170, [#allocation6], 256, 256, 16
        $region20: #{swiglu_mlp.1} parent=11 // pred_fallthru
          _
        // Predicated region
        $region21: #{swiglu_mlp.1} parent=11 // pred_check
          %p176 = pneg %p107
        $region22: #{swiglu_mlp.1} parent=11 // pred_check_branch
          %178 = sbr.rel (%p176) target = $region24
        $region23: #{swiglu_mlp.1} parent=11 // pred_region
          %180 = vsyncadd [#allocation9], 0
          %s181 = sshll.u32 %s3, 4
          %s182 = int_to_ptr.hbm [resolvable:$true] %s181
          %s183 = sshll.u32 [#allocation8], 4
          %s184 = int_to_ptr.vmem [resolvable:$true] %s183
          %189 = dma.hbm_to_vmem [thread:$0]  %s182, 4096, %s184, [#allocation9], 128, 128, 8
        $region24: #{swiglu_mlp.1} parent=11 // pred_fallthru
          _
      $region12: #{swiglu_mlp.1} parent=5 // pred_fallthru
        _
      %p190 = scmp.lt.s32.totalorder %s18, 2
      // Predicated region
      $region25: #{swiglu_mlp.1} parent=5 // pred_check
        %p191 = pneg %p190
      $region26: #{swiglu_mlp.1} parent=5 // pred_check_branch
        %193 = sbr.rel (%p191) target = $region28
      $region27: #{swiglu_mlp.1} parent=5 // pred_region
        // Predicated region
        $region29: #{swiglu_mlp.1} parent=27 // pred_check
          %p194 = pneg %p38
        $region30: #{swiglu_mlp.1} parent=27 // pred_check_branch
          %196 = sbr.rel (%p194) target = $region32
        $region31: #{swiglu_mlp.1} parent=27 // pred_region
          %s197 = sand.u32 %s28, 1
          %s198 = scalar_lea.sflag [#allocation3], %s197
          %s199 = sand.u32 %s28, 1
          %s200 = smul.addr %s199, 8
          %s201 = scalar_lea.vmem [#allocation2], %s200
          %203 = vsyncadd %s198, 0
          %s204 = smul.addr %s18, 8
          %s205 = scalar_lea.hbm %s0, %s204
          %s207 = sshll.u32 %s205, 4
          %s208 = int_to_ptr.hbm [resolvable:$true] %s207
          %s209 = sshll.u32 %s201, 4
          %s210 = int_to_ptr.vmem [resolvable:$true] %s209
          %212 = dma.hbm_to_vmem [thread:$0]  %s208, 128, %s210, %s198
        $region32: #{swiglu_mlp.1} parent=27 // pred_fallthru
          _
      $region28: #{swiglu_mlp.1} parent=5 // pred_fallthru
        _
      %p213 = scmp.le.s32.totalorder 1, %s18
      %p214 = scmp.lt.s32.totalorder %s18, 3
      %p215 = pnand %p213, %p214
      %p216 = pneg %p215
      // Predicated region
      $region33: #{swiglu_mlp.1} parent=5 // pred_check
        _
      $region34: #{swiglu_mlp.1} parent=5 // pred_check_branch
        %218 = sbr.rel (%p215) target = $region36
      $region35: #{swiglu_mlp.1} parent=5 // pred_region
        %s219 = ssub.s32 %s18, 1
        %s220 = sand.u32 %s31, 1
        %s221 = scalar_lea.sflag [#allocation3], %s220
        %s222 = sand.u32 %s31, 1
        %s223 = smul.addr %s222, 8
        %s224 = scalar_lea.vmem [#allocation2], %s223
        // Predicated region
        $region37: #{swiglu_mlp.1} parent=35 // pred_check
          %p225 = pneg %p44
        $region38: #{swiglu_mlp.1} parent=35 // pred_check_branch
          %227 = sbr.rel (%p225) target = $region40
        $region39: #{swiglu_mlp.1} parent=35 // pred_region
          %229 = dma.done %s221, 128
        $region40: #{swiglu_mlp.1} parent=35 // pred_fallthru
          _
        // Predicated region
        $region41: #{swiglu_mlp.1} parent=35 // pred_check
          %p230 = pneg %p65
        $region42: #{swiglu_mlp.1} parent=35 // pred_check_branch
          %232 = sbr.rel (%p230) target = $region44
        $region43: #{swiglu_mlp.1} parent=35 // pred_region
          %234 = dma.done [#allocation6], 4096
        $region44: #{swiglu_mlp.1} parent=35 // pred_fallthru
          _
        // Predicated region
        $region45: #{swiglu_mlp.1} parent=35 // pred_check
          %p235 = pneg %p86
        $region46: #{swiglu_mlp.1} parent=35 // pred_check_branch
          %237 = sbr.rel (%p235) target = $region48
        $region47: #{swiglu_mlp.1} parent=35 // pred_region
          %239 = dma.done [#allocation6], 4096
        $region48: #{swiglu_mlp.1} parent=35 // pred_fallthru
          _
        // Predicated region
        $region49: #{swiglu_mlp.1} parent=35 // pred_check
          %p240 = pneg %p107
        $region50: #{swiglu_mlp.1} parent=35 // pred_check_branch
          %242 = sbr.rel (%p240) target = $region52
        $region51: #{swiglu_mlp.1} parent=35 // pred_region
          %244 = dma.done [#allocation9], 4096
        $region52: #{swiglu_mlp.1} parent=35 // pred_fallthru
          _
        %s245 = sand.u32 %s31, 1
        %s246 = scalar_lea.sflag [#allocation3], %s245
        %s247 = sand.u32 %s31, 1
        %s248 = smul.addr %s247, 8
        %s249 = scalar_lea.vmem [#allocation2], %s248
        %p250 = pneg %p44
        %p251 = pneg %p41
        %p252 = pneg %p65
        %p253 = pneg %p62
        %p254 = pneg %p86
        %p255 = pneg %p83
        %p256 = pneg %p107
        %p257 = pneg %p104
        %p258 = pneg %p133
        %p259 = pneg %p130
        %s260 = sand.u32 %s120, 1
        %s261 = scalar_lea.sflag [#allocation4], %s260
        %s262 = sand.u32 %s120, 1
        %s263 = smul.addr %s262, 8
        %s264 = scalar_lea.vmem [#allocation10], %s263
        %v265 = vld [vmem:[%s224] sm:$0xff]
        %v266 = vld [vmem:[#allocation5] sm:$0xff]
        %v267 = vld [vmem:[#allocation5 + $0x8] sm:$0xff]
        %v268 = vld [vmem:[#allocation5 + $0x10] sm:$0xff]
        %v269 = vld [vmem:[#allocation5 + $0x18] sm:$0xff]
        %v270 = vld [vmem:[#allocation5 + $0x20] sm:$0xff]
        %v271 = vld [vmem:[#allocation5 + $0x28] sm:$0xff]
        %v272 = vld [vmem:[#allocation5 + $0x30] sm:$0xff]
        %v273 = vld [vmem:[#allocation5 + $0x38] sm:$0xff]
        %v274 = vld [vmem:[#allocation5 + $0x40] sm:$0xff]
        %v275 = vld [vmem:[#allocation5 + $0x48] sm:$0xff]
        %v276 = vld [vmem:[#allocation5 + $0x50] sm:$0xff]
        %v277 = vld [vmem:[#allocation5 + $0x58] sm:$0xff]
        %v278 = vld [vmem:[#allocation5 + $0x60] sm:$0xff]
        %v279 = vld [vmem:[#allocation5 + $0x68] sm:$0xff]
        %v280 = vld [vmem:[#allocation5 + $0x70] sm:$0xff]
        %v281 = vld [vmem:[#allocation5 + $0x78] sm:$0xff]
        %v282 = vld [vmem:[#allocation5 + $0x80] sm:$0xff]
        %v283 = vld [vmem:[#allocation5 + $0x88] sm:$0xff]
        %v284 = vld [vmem:[#allocation5 + $0x90] sm:$0xff]
        %v285 = vld [vmem:[#allocation5 + $0x98] sm:$0xff]
        %v286 = vld [vmem:[#allocation5 + $0xa0] sm:$0xff]
        %v287 = vld [vmem:[#allocation5 + $0xa8] sm:$0xff]
        %v288 = vld [vmem:[#allocation5 + $0xb0] sm:$0xff]
        %v289 = vld [vmem:[#allocation5 + $0xb8] sm:$0xff]
        %v290 = vld [vmem:[#allocation5 + $0xc0] sm:$0xff]
        %v291 = vld [vmem:[#allocation5 + $0xc8] sm:$0xff]
        %v292 = vld [vmem:[#allocation5 + $0xd0] sm:$0xff]
        %v293 = vld [vmem:[#allocation5 + $0xd8] sm:$0xff]
        %v294 = vld [vmem:[#allocation5 + $0xe0] sm:$0xff]
        %v295 = vld [vmem:[#allocation5 + $0xe8] sm:$0xff]
        %v296 = vld [vmem:[#allocation5 + $0xf0] sm:$0xff]
        %v297 = vld [vmem:[#allocation5 + $0xf8] sm:$0xff]
        %298 = vmatpush.msra.mxu0 %v296
        %299 = vmatpush.msra.mxu0 %v294
        %300 = vmatpush.msra.mxu0 %v292
        %301 = vmatpush.msra.mxu0 %v290
        %302 = vmatpush.msra.mxu0 %v288
        %303 = vmatpush.msra.mxu0 %v286
        %304 = vmatpush.msra.mxu0 %v284
        %305 = vmatpush.msra.mxu0 %v282
        %306 = vmatpush.msra.mxu0 %v280
        %307 = vmatpush.msra.mxu0 %v278
        %308 = vmatpush.msra.mxu0 %v276
        %309 = vmatpush.msra.mxu0 %v274
        %310 = vmatpush.msra.mxu0 %v272
        %311 = vmatpush.msra.mxu0 %v270
        %312 = vmatpush.msra.mxu0 %v268
        %313 = vmatpush.msra.mxu0 %v266
        %314 = vmatmul.f32.gmra.mxu0 %v265
        %v315 = vpop.f32.mrf.mxu0
        %v316 = vadd.f32 0.0, %v315
        %317 = vdwg.mxu0
        %318 = vmatpush.msra.mxu0 %v297
        %319 = vmatpush.msra.mxu0 %v295
        %320 = vmatpush.msra.mxu0 %v293
        %321 = vmatpush.msra.mxu0 %v291
        %322 = vmatpush.msra.mxu0 %v289
        %323 = vmatpush.msra.mxu0 %v287
        %324 = vmatpush.msra.mxu0 %v285
        %325 = vmatpush.msra.mxu0 %v283
        %326 = vmatpush.msra.mxu0 %v281
        %327 = vmatpush.msra.mxu0 %v279
        %328 = vmatpush.msra.mxu0 %v277
        %329 = vmatpush.msra.mxu0 %v275
        %330 = vmatpush.msra.mxu0 %v273
        %331 = vmatpush.msra.mxu0 %v271
        %332 = vmatpush.msra.mxu0 %v269
        %333 = vmatpush.msra.mxu0 %v267
        %334 = vmatmul.f32.gmra.mxu0 %v265
        %v335 = vpop.f32.mrf.mxu0
        %v336 = vadd.f32 0.0, %v335
        %337 = vdwg.mxu0
        %v338 = vld [vmem:[#allocation7] sm:$0xff]
        %v339 = vld [vmem:[#allocation7 + $0x8] sm:$0xff]
        %v340 = vld [vmem:[#allocation7 + $0x10] sm:$0xff]
        %v341 = vld [vmem:[#allocation7 + $0x18] sm:$0xff]
        %v342 = vld [vmem:[#allocation7 + $0x20] sm:$0xff]
        %v343 = vld [vmem:[#allocation7 + $0x28] sm:$0xff]
        %v344 = vld [vmem:[#allocation7 + $0x30] sm:$0xff]
        %v345 = vld [vmem:[#allocation7 + $0x38] sm:$0xff]
        %v346 = vld [vmem:[#allocation7 + $0x40] sm:$0xff]
        %v347 = vld [vmem:[#allocation7 + $0x48] sm:$0xff]
        %v348 = vld [vmem:[#allocation7 + $0x50] sm:$0xff]
        %v349 = vld [vmem:[#allocation7 + $0x58] sm:$0xff]
        %v350 = vld [vmem:[#allocation7 + $0x60] sm:$0xff]
        %v351 = vld [vmem:[#allocation7 + $0x68] sm:$0xff]
        %v352 = vld [vmem:[#allocation7 + $0x70] sm:$0xff]
        %v353 = vld [vmem:[#allocation7 + $0x78] sm:$0xff]
        %v354 = vld [vmem:[#allocation7 + $0x80] sm:$0xff]
        %v355 = vld [vmem:[#allocation7 + $0x88] sm:$0xff]
        %v356 = vld [vmem:[#allocation7 + $0x90] sm:$0xff]
        %v357 = vld [vmem:[#allocation7 + $0x98] sm:$0xff]
        %v358 = vld [vmem:[#allocation7 + $0xa0] sm:$0xff]
        %v359 = vld [vmem:[#allocation7 + $0xa8] sm:$0xff]
        %v360 = vld [vmem:[#allocation7 + $0xb0] sm:$0xff]
        %v361 = vld [vmem:[#allocation7 + $0xb8] sm:$0xff]
        %v362 = vld [vmem:[#allocation7 + $0xc0] sm:$0xff]
        %v363 = vld [vmem:[#allocation7 + $0xc8] sm:$0xff]
        %v364 = vld [vmem:[#allocation7 + $0xd0] sm:$0xff]
        %v365 = vld [vmem:[#allocation7 + $0xd8] sm:$0xff]
        %v366 = vld [vmem:[#allocation7 + $0xe0] sm:$0xff]
        %v367 = vld [vmem:[#allocation7 + $0xe8] sm:$0xff]
        %v368 = vld [vmem:[#allocation7 + $0xf0] sm:$0xff]
        %v369 = vld [vmem:[#allocation7 + $0xf8] sm:$0xff]
        %370 = vmatpush.msra.mxu0 %v368
        %371 = vmatpush.msra.mxu0 %v366
        %372 = vmatpush.msra.mxu0 %v364
        %373 = vmatpush.msra.mxu0 %v362
        %374 = vmatpush.msra.mxu0 %v360
        %375 = vmatpush.msra.mxu0 %v358
        %376 = vmatpush.msra.mxu0 %v356
        %377 = vmatpush.msra.mxu0 %v354
        %378 = vmatpush.msra.mxu0 %v352
        %379 = vmatpush.msra.mxu0 %v350
        %380 = vmatpush.msra.mxu0 %v348
        %381 = vmatpush.msra.mxu0 %v346
        %382 = vmatpush.msra.mxu0 %v344
        %383 = vmatpush.msra.mxu0 %v342
        %384 = vmatpush.msra.mxu0 %v340
        %385 = vmatpush.msra.mxu0 %v338
        %386 = vmatmul.f32.gmra.mxu0 %v265
        %v387 = vpop.f32.mrf.mxu0
        %v388 = vadd.f32 0.0, %v387
        %389 = vdwg.mxu0
        %390 = vmatpush.msra.mxu0 %v369
        %391 = vmatpush.msra.mxu0 %v367
        %392 = vmatpush.msra.mxu0 %v365
        %393 = vmatpush.msra.mxu0 %v363
        %394 = vmatpush.msra.mxu0 %v361
        %395 = vmatpush.msra.mxu0 %v359
        %396 = vmatpush.msra.mxu0 %v357
        %397 = vmatpush.msra.mxu0 %v355
        %398 = vmatpush.msra.mxu0 %v353
        %399 = vmatpush.msra.mxu0 %v351
        %400 = vmatpush.msra.mxu0 %v349
        %401 = vmatpush.msra.mxu0 %v347
        %402 = vmatpush.msra.mxu0 %v345
        %403 = vmatpush.msra.mxu0 %v343
        %404 = vmatpush.msra.mxu0 %v341
        %405 = vmatpush.msra.mxu0 %v339
        %406 = vmatmul.f32.gmra.mxu0 %v265
        %v407 = vpop.f32.mrf.mxu0
        %v408 = vadd.f32 0.0, %v407
        %409 = vdwg.mxu0
        %v410 = vxor.u32 %v316, 2147483648
        %v411 = vxor.u32 %v336, 2147483648
        %v412 = vmul.f32 %v410, 1.442695
        %v413 = vpow.pop %v412
        %v414 = vmul.f32 %v411, 1.442695
        %v415 = vpow.pop %v414
        %v416 = vadd.f32 %v413, 1.0
        %v417 = vadd.f32 %v415, 1.0
        %v418 = vrcp.pop %v416
        %v419 = vmul.f32 %v416, %v418
        %v420 = vsub.f32 1.0, %v419
        %v421 = vmul.f32 %v418, %v420
        %v422 = vadd.f32 %v418, %v421
        %vm423 = vweird.f32 %v416
        %vm424 = vweird.f32 %v418
        %vm425 = vmor %vm423, %vm424
        %v426 = vsel %vm425, %v418, %v422
        %v427 = vand.u32 2147483647, %v416
        %vm428 = vcmp.eq.f32.partialorder %v427, 8.507059e+37
        %v429 = vand.u32 %v416, 2147483648
        %v430 = vor.u32 1.1754944e-38, %v429
        %v431 = vsel %vm428, %v430, %v426
        %v432 = vmul.f32 1.0, %v431
        %v433 = vrcp.pop %v417
        %v434 = vmul.f32 %v417, %v433
        %v435 = vsub.f32 1.0, %v434
        %v436 = vmul.f32 %v433, %v435
        %v437 = vadd.f32 %v433, %v436
        %vm438 = vweird.f32 %v417
        %vm439 = vweird.f32 %v433
        %vm440 = vmor %vm438, %vm439
        %v441 = vsel %vm440, %v433, %v437
        %v442 = vand.u32 2147483647, %v417
        %vm443 = vcmp.eq.f32.partialorder %v442, 8.507059e+37
        %v444 = vand.u32 %v417, 2147483648
        %v445 = vor.u32 1.1754944e-38, %v444
        %v446 = vsel %vm443, %v445, %v441
        %v447 = vmul.f32 1.0, %v446
        %v448 = vmul.f32 %v316, %v432
        %v449 = vmul.f32 %v336, %v447
        %v450 = vmul.f32 %v448, %v388
        %v451 = vmul.f32 %v449, %v408
        %v452 = vld [vmem:[#allocation8] sm:$0xff]
        %v453 = vld [vmem:[#allocation8 + $0x8] sm:$0xff]
        %v454 = vld [vmem:[#allocation8 + $0x10] sm:$0xff]
        %v455 = vld [vmem:[#allocation8 + $0x18] sm:$0xff]
        %v456 = vld [vmem:[#allocation8 + $0x20] sm:$0xff]
        %v457 = vld [vmem:[#allocation8 + $0x28] sm:$0xff]
        %v458 = vld [vmem:[#allocation8 + $0x30] sm:$0xff]
        %v459 = vld [vmem:[#allocation8 + $0x38] sm:$0xff]
        %v460 = vld [vmem:[#allocation8 + $0x40] sm:$0xff]
        %v461 = vld [vmem:[#allocation8 + $0x48] sm:$0xff]
        %v462 = vld [vmem:[#allocation8 + $0x50] sm:$0xff]
        %v463 = vld [vmem:[#allocation8 + $0x58] sm:$0xff]
        %v464 = vld [vmem:[#allocation8 + $0x60] sm:$0xff]
        %v465 = vld [vmem:[#allocation8 + $0x68] sm:$0xff]
        %v466 = vld [vmem:[#allocation8 + $0x70] sm:$0xff]
        %v467 = vld [vmem:[#allocation8 + $0x78] sm:$0xff]
        %v468 = vld [vmem:[#allocation8 + $0x80] sm:$0xff]
        %v469 = vld [vmem:[#allocation8 + $0x88] sm:$0xff]
        %v470 = vld [vmem:[#allocation8 + $0x90] sm:$0xff]
        %v471 = vld [vmem:[#allocation8 + $0x98] sm:$0xff]
        %v472 = vld [vmem:[#allocation8 + $0xa0] sm:$0xff]
        %v473 = vld [vmem:[#allocation8 + $0xa8] sm:$0xff]
        %v474 = vld [vmem:[#allocation8 + $0xb0] sm:$0xff]
        %v475 = vld [vmem:[#allocation8 + $0xb8] sm:$0xff]
        %v476 = vld [vmem:[#allocation8 + $0xc0] sm:$0xff]
        %v477 = vld [vmem:[#allocation8 + $0xc8] sm:$0xff]
        %v478 = vld [vmem:[#allocation8 + $0xd0] sm:$0xff]
        %v479 = vld [vmem:[#allocation8 + $0xd8] sm:$0xff]
        %v480 = vld [vmem:[#allocation8 + $0xe0] sm:$0xff]
        %v481 = vld [vmem:[#allocation8 + $0xe8] sm:$0xff]
        %v482 = vld [vmem:[#allocation8 + $0xf0] sm:$0xff]
        %v483 = vld [vmem:[#allocation8 + $0xf8] sm:$0xff]
        %484 = vmatpush.msra.mxu0 %v467
        %485 = vmatpush.msra.mxu0 %v466
        %486 = vmatpush.msra.mxu0 %v465
        %487 = vmatpush.msra.mxu0 %v464
        %488 = vmatpush.msra.mxu0 %v463
        %489 = vmatpush.msra.mxu0 %v462
        %490 = vmatpush.msra.mxu0 %v461
        %491 = vmatpush.msra.mxu0 %v460
        %492 = vmatpush.msra.mxu0 %v459
        %493 = vmatpush.msra.mxu0 %v458
        %494 = vmatpush.msra.mxu0 %v457
        %495 = vmatpush.msra.mxu0 %v456
        %496 = vmatpush.msra.mxu0 %v455
        %497 = vmatpush.msra.mxu0 %v454
        %498 = vmatpush.msra.mxu0 %v453
        %499 = vmatpush.msra.mxu0 %v452
        %500 = vmatmul.f32.gmra.mxu0 %v450
        %v501 = vpop.f32.mrf.mxu0
        %v502 = vadd.f32 0.0, %v501
        %503 = vdwg.mxu0
        %504 = vmatpush.msra.mxu0 %v483
        %505 = vmatpush.msra.mxu0 %v482
        %506 = vmatpush.msra.mxu0 %v481
        %507 = vmatpush.msra.mxu0 %v480
        %508 = vmatpush.msra.mxu0 %v479
        %509 = vmatpush.msra.mxu0 %v478
        %510 = vmatpush.msra.mxu0 %v477
        %511 = vmatpush.msra.mxu0 %v476
        %512 = vmatpush.msra.mxu0 %v475
        %513 = vmatpush.msra.mxu0 %v474
        %514 = vmatpush.msra.mxu0 %v473
        %515 = vmatpush.msra.mxu0 %v472
        %516 = vmatpush.msra.mxu0 %v471
        %517 = vmatpush.msra.mxu0 %v470
        %518 = vmatpush.msra.mxu0 %v469
        %519 = vmatpush.msra.mxu0 %v468
        %520 = vmatmul.f32.gmra.mxu0 %v451
        %v521 = vpop.f32.mrf.mxu0
        %v522 = vadd.f32 %v502, %v521
        %523 = vdwg.mxu0
        %524 = vst [vmem:[%s264] sm:$0xff] %v522
        %s525 = sand.u32 %s120, 1
        %s526 = scalar_lea.sflag [#allocation4], %s525
        %s527 = sand.u32 %s120, 1
        %s528 = smul.addr %s527, 8
        %s529 = scalar_lea.vmem [#allocation10], %s528
        // Predicated region
        $region53: #{swiglu_mlp.1} parent=35 // pred_check
          %p530 = pneg %p130
        $region54: #{swiglu_mlp.1} parent=35 // pred_check_branch
          %532 = sbr.rel (%p530) target = $region56
        $region55: #{swiglu_mlp.1} parent=35 // pred_region
          %534 = vsyncadd %s526, 0
          %s535 = smul.addr %s23, 8
          %s536 = scalar_lea.hbm %s4, %s535
          %s538 = sshll.u32 %s529, 4
          %s539 = int_to_ptr.vmem [resolvable:$true] %s538
          %s540 = sshll.u32 %s536, 4
          %s541 = int_to_ptr.hbm [resolvable:$true] %s540
          %543 = dma.vmem_to_hbm [thread:$0]  %s539, 128, %s541, %s526
        $region56: #{swiglu_mlp.1} parent=35 // pred_fallthru
          _
      $region36: #{swiglu_mlp.1} parent=5 // pred_fallthru
        _
      %p544 = scmp.le.s32.totalorder 2, %s18
      // Predicated region
      $region57: #{swiglu_mlp.1} parent=5 // pred_check
        %p545 = pneg %p544
      $region58: #{swiglu_mlp.1} parent=5 // pred_check_branch
        %547 = sbr.rel (%p545) target = $region60
      $region59: #{swiglu_mlp.1} parent=5 // pred_region
        %s548 = ssub.s32 %s18, 2
        // Predicated region
        $region61: #{swiglu_mlp.1} parent=59 // pred_check
          %p549 = pneg %p136
        $region62: #{swiglu_mlp.1} parent=59 // pred_check_branch
          %551 = sbr.rel (%p549) target = $region64
        $region63: #{swiglu_mlp.1} parent=59 // pred_region
          %s552 = sand.u32 %s121, 1
          %s553 = scalar_lea.sflag [#allocation4], %s552
          %s554 = sand.u32 %s121, 1
          %s555 = smul.addr %s554, 8
          %s556 = scalar_lea.vmem [#allocation10], %s555
          %558 = dma.done %s553, 128
        $region64: #{swiglu_mlp.1} parent=59 // pred_fallthru
          _
      $region60: #{swiglu_mlp.1} parent=5 // pred_fallthru
        _
    $region6: #{swiglu_mlp.1} parent=1 // loop_footer
      %s22 = sadd.s32 1, %s18
    $region7: #{swiglu_mlp.1} parent=1 // loop_footer_branch
      %17 = sbr.rel target = $region3
    $region8: #{swiglu_mlp.1} parent=1 // loop_exit
      _
    %559 = vsyncpa [#allocation3], 1
    %s560 = scalar_lea.sflag [#allocation3], 1
    %561 = vsyncpa %s560, 1
    %562 = vsyncpa [#allocation6], 1
    %563 = vsyncpa [#allocation9], 1
    %564 = vsyncpa [#allocation4], 1
    %s565 = scalar_lea.sflag [#allocation4], 1
    %566 = vsyncpa %s565, 1

</llo_original>
